<compile_context>
chip_gen: v7x
topology: tpu7x:2x2x1
jax: 0.10.0
libtpu: 0.0.40
codegen_flags: <defaults>
</compile_context>

<pallas_src>
import jax
import jax.numpy as jnp
from jax.experimental import pallas as pl
from jax.experimental.pallas import tpu as pltpu


def _round_up(x, m):
    return ((x + m - 1) // m) * m


def _pick_tk(F, preferred=512):
    """K-tile over the image-feature dim F.

    Whole-F resident when small; otherwise the largest MXU-friendly divisor
    (multiples of 256 preferred for the 256-wide v6e/v7x MXU).  TK always
    divides F (or equals it), so no masking of the reduction is needed.
    """
    if F <= 1024:
        return F
    for cand in (preferred, 512, 256, 128):
        if F % cand == 0:
            return cand
    return F  # no clean 128-multiple divisor: keep F resident (rare corner)


def _vmem_limit_bytes():
    # Raise the scoped-VMEM cap above the 16/32 MiB defaults so K-tiled
    # AlexNet-sized weight slabs fit, while leaving headroom below the
    # physical capacity (64 MiB on v7x, 128 MiB on v5e/v6e).
    try:
        cap = pltpu.get_tpu_info().vmem_capacity_bytes
    except Exception:
        cap = 128 * 1024 * 1024
    return int(min(100 * 1024 * 1024, cap * 3 // 4))


def _alex_head_kernel(x_ref, w1_ref, b1_ref, w2_ref, b2_ref, o_ref, acc_ref):
    k = pl.program_id(1)

    @pl.when(k == 0)
    def _init():
        acc_ref[...] = jnp.zeros_like(acc_ref)

    # In-kernel bf16 cast of the x tile (free VPU filler under MXU/DMA);
    # f32 MXU accumulation via preferred_element_type.
    acc_ref[...] += jnp.dot(
        x_ref[...].astype(jnp.bfloat16), w1_ref[...],
        preferred_element_type=jnp.float32)

    @pl.when(k == pl.num_programs(1) - 1)
    def _finalize():
        # f32 bias + ReLU on the VPU (v5e has no bf16 VALU/EUP).
        h = jnp.maximum(acc_ref[...] + b1_ref[...], 0.0)
        # Lane-dense f32 store: C_pad is a multiple of 128 -> unmasked vst.
        o_ref[...] = (
            jnp.dot(h.astype(jnp.bfloat16), w2_ref[...],
                    preferred_element_type=jnp.float32)
            + b2_ref[...])


def alex_head(x, w1_bf, b1_f32, w2_bf, b2_f32, *, num_classes,
              block_b=256, block_k=512):
    """Fused 2-layer MLP head: relu(x @ W1 + b1) @ W2 + b2.

    Expects preprocessed params: W1/W2 in bfloat16, b1/b2 in float32 with
    shape (1, H) / (1, C_pad), W2/b2 already zero-padded to C_pad lanes.
    """
    B, F = x.shape
    H = w1_bf.shape[1]
    C_pad = w2_bf.shape[1]

    # --- batch tile: multiple of 8 (f32 x / f32 out sublanes); >= 2 grid
    #     steps when B > 16 so both v7x TensorCores get work. ----------------
    n_b = max(1, pl.cdiv(B, block_b))
    if B > 16:
        n_b = max(2, n_b)
    TB = min(_round_up(pl.cdiv(B, n_b), 8), _round_up(B, 8))
    assert TB % 8 == 0, "row tile must stay a multiple of 8 (f32 sublanes)"
    grid_b = pl.cdiv(B, TB)        # partial last block: OOB output rows masked

    # --- K tile over F (reduction axis, last in grid) ------------------------
    TK = _pick_tk(F, block_k)
    assert F % TK == 0
    grid_k = F // TK

    x = jnp.asarray(x, jnp.float32)   # bf16 cast happens inside the kernel

    def _call(single_buffer_consts):
        # Constant-index operands never change across grid steps; single
        # buffering them frees VMEM headroom for the x / W1 tiles.
        const_mode = ({"pipeline_mode": pl.Buffered(1)}
                      if single_buffer_consts else {})
        return pl.pallas_call(
            _alex_head_kernel,
            out_shape=jax.ShapeDtypeStruct((B, C_pad), jnp.float32),
            grid_spec=pltpu.PrefetchScalarGridSpec(
                num_scalar_prefetch=0,
                grid=(grid_b, grid_k),
                in_specs=[
                    pl.BlockSpec((TB, TK), lambda i, k: (i, k)),      # x tile
                    pl.BlockSpec((TK, H), lambda i, k: (k, 0)),       # W1 K-slab
                    pl.BlockSpec((1, H), lambda i, k: (0, 0), **const_mode),
                    pl.BlockSpec((H, C_pad), lambda i, k: (0, 0), **const_mode),
                    pl.BlockSpec((1, C_pad), lambda i, k: (0, 0), **const_mode),
                ],
                out_specs=pl.BlockSpec((TB, C_pad), lambda i, k: (i, 0)),
                scratch_shapes=[pltpu.VMEM((TB, H), jnp.float32)],    # f32 acc
            ),
            compiler_params=pltpu.CompilerParams(
                dimension_semantics=("parallel", "arbitrary"),
                vmem_limit_bytes=_vmem_limit_bytes(),
            ),
        )(x, w1_bf, b1_f32, w2_bf, b2_f32)

    try:
        out_padded = _call(True)
    except Exception:
        # Runtime without BlockSpec.pipeline_mode support: fall back to the
        # default double-buffered constant operands (identical results).
        out_padded = _call(False)

    if C_pad != num_classes:
        out_padded = out_padded[:, :num_classes]
    return out_padded


class NetWrapper:
    """JAX mirror of the PyTorch NetWrapper: stores the graph context and
    returns only the image-feature ("alex") branch of the inner model."""

    def __init__(self, params, edge_index, edge_weight, batch):
        w1, b1, w2, b2 = params
        self.edge_index = edge_index    # stored; feeds only the discarded output
        self.edge_weight = edge_weight
        self.batch = batch

        self.num_classes = w2.shape[1]
        # Lane padding: 128 fits the v5e MXU exactly for small heads; use 256
        # multiples once C outgrows 128 (v6e/v7x MXU is 2x256-wide).
        lane = 128 if self.num_classes <= 128 else 256
        c_pad = _round_up(self.num_classes, lane)
        pad_c = c_pad - self.num_classes

        # One-time weight preprocessing, hoisted out of the per-forward path:
        # bf16 matmul operands, f32 biases, lane-padded W2/b2.
        self._w1 = jnp.asarray(w1, jnp.bfloat16)
        self._b1 = jnp.asarray(b1, jnp.float32).reshape(1, -1)
        self._w2 = jnp.pad(jnp.asarray(w2, jnp.bfloat16), ((0, 0), (0, pad_c)))
        self._b2 = jnp.pad(jnp.asarray(b2, jnp.float32).reshape(1, -1),
                           ((0, 0), (0, pad_c)))

    def forward(self, image_features):
        only_alex_output = alex_head(
            image_features, self._w1, self._b1, self._w2, self._b2,
            num_classes=self.num_classes)
        return only_alex_output


if __name__ == "__main__":
    # Small, deterministic shapes: B=8 samples, F=128 image-feature dim,
    # H=128 hidden, C=16 classes.
    B, F, H, C = 8, 128, 128, 16

    key = jax.random.PRNGKey(0)
    kx, kw1, kb1, kw2, kb2 = jax.random.split(key, 5)
    image_features = jax.random.normal(kx, (B, F), jnp.float32)
    w1 = 0.05 * jax.random.normal(kw1, (F, H), jnp.float32)
    b1 = 0.05 * jax.random.normal(kb1, (1, H), jnp.float32)
    w2 = 0.05 * jax.random.normal(kw2, (H, C), jnp.float32)
    b2 = 0.05 * jax.random.normal(kb2, (1, C), jnp.float32)

    # Constructor-style graph context (mirrors the PyTorch __init__ args).
    num_nodes, num_edges = 16, 32
    edge_index = jax.random.randint(
        jax.random.PRNGKey(1), (2, num_edges), 0, num_nodes, dtype=jnp.int32
    )
    edge_weight = jnp.ones((num_edges,), jnp.float32)
    batch = jnp.zeros((num_nodes,), jnp.int32)

    net = NetWrapper((w1, b1, w2, b2), edge_index, edge_weight, batch)
    out = net.forward(image_features)
    jax.block_until_ready(out)
    assert out.shape == (B, C)
    assert out.dtype == jnp.float32

    # Reference 1: same bf16-operand / f32-accumulate arithmetic as the kernel.
    xb, w1b, w2b = (a.astype(jnp.bfloat16) for a in (image_features, w1, w2))
    h_ref = jnp.maximum(
        jnp.dot(xb, w1b, preferred_element_type=jnp.float32) + b1, 0.0
    )
    ref_bf16 = (
        jnp.dot(h_ref.astype(jnp.bfloat16), w2b, preferred_element_type=jnp.float32)
        + b2
    )
    assert jnp.allclose(out, ref_bf16, atol=2e-3, rtol=2e-3), "mismatch vs bf16 ref"

    # Reference 2: full-f32 math, looser tolerance (bf16 operand quantization).
    ref_f32 = jnp.maximum(image_features @ w1 + b1, 0.0) @ w2 + b2
    assert jnp.allclose(out, ref_f32, atol=5e-2, rtol=5e-2), "mismatch vs f32 ref"

    print("KERNEL_OK")
</pallas_src>

<mosaic_0001>
module attributes {stable_mosaic.version = 11 : i64} {
  func.func @_alex_head_kernel(%arg0: i32, %arg1: i32, %arg2: memref<8x128xf32, #tpu.memory_space<vmem>>, %arg3: memref<128x128xbf16, #tpu.memory_space<vmem>>, %arg4: memref<1x128xf32, #tpu.memory_space<vmem>>, %arg5: memref<128x128xbf16, #tpu.memory_space<vmem>>, %arg6: memref<1x128xf32, #tpu.memory_space<vmem>>, %arg7: memref<8x128xf32, #tpu.memory_space<vmem>>, %arg8: memref<8x128xf32, #tpu.memory_space<vmem>>) attributes {dimension_semantics = [#tpu.dimension_semantics<parallel>, #tpu.dimension_semantics<arbitrary>], iteration_bounds = array<i64: 1, 1>, scalar_prefetch = 0 : i64, scratch_operands = 1 : i64, tpu.core_type = #tpu.core_type<tc>, window_params = [{transform_indices = @transform_0, window_bounds = array<i64: 8, 128>}, {transform_indices = @transform_1, window_bounds = array<i64: 128, 128>}, {pipeline_mode = #tpu.pipeline_mode<synchronous>, transform_indices = @transform_2, window_bounds = array<i64: 1, 128>}, {pipeline_mode = #tpu.pipeline_mode<synchronous>, transform_indices = @transform_3, window_bounds = array<i64: 128, 128>}, {pipeline_mode = #tpu.pipeline_mode<synchronous>, transform_indices = @transform_4, window_bounds = array<i64: 1, 128>}, {transform_indices = @transform_5, window_bounds = array<i64: 8, 128>}]} {
    %c0_i32 = arith.constant 0 : i32
    %0 = arith.cmpi eq, %arg1, %c0_i32 : i32
    %1 = arith.extui %0 : i1 to i32
    %c0_i32_0 = arith.constant 0 : i32
    %2 = arith.cmpi ne, %1, %c0_i32_0 : i32
    scf.if %2 {
      %cst_10 = arith.constant 0.000000e+00 : f32
      %13 = vector.broadcast %cst_10 : f32 to vector<8x128xf32>
      %c0_11 = arith.constant 0 : index
      %c0_12 = arith.constant 0 : index
      %14 = vector.load %arg8[%c0_11, %c0_12] : memref<8x128xf32, #tpu.memory_space<vmem>>, vector<8x128xf32>
      tpu.vector_store %arg8[%c0_11, %c0_12], %13 {strides = array<i32>} : memref<8x128xf32, #tpu.memory_space<vmem>>, vector<8x128xf32>,
    } else {
    }
    %c0 = arith.constant 0 : index
    %c0_1 = arith.constant 0 : index
    %3 = vector.load %arg8[%c0, %c0_1] : memref<8x128xf32, #tpu.memory_space<vmem>>, vector<8x128xf32>
    %c0_2 = arith.constant 0 : index
    %c0_3 = arith.constant 0 : index
    %4 = vector.load %arg2[%c0_2, %c0_3] : memref<8x128xf32, #tpu.memory_space<vmem>>, vector<8x128xf32>
    %5 = arith.truncf %4 : vector<8x128xf32> to vector<8x128xbf16>
    %c0_4 = arith.constant 0 : index
    %c0_5 = arith.constant 0 : index
    %6 = vector.load %arg3[%c0_4, %c0_5] : memref<128x128xbf16, #tpu.memory_space<vmem>>, vector<128x128xbf16>
    %cst = arith.constant dense<0.000000e+00> : vector<8x128xf32>
    %7 = tpu.matmul %5, %6, %cst {dimension_numbers = #tpu.dot_dimension_numbers<[1], [0], [0], [1], [0, 0, 1, 1], [], []>} : vector<8x128xbf16>, vector<128x128xbf16>, vector<8x128xf32> -> vector<8x128xf32>
    %8 = arith.addf %3, %7 : vector<8x128xf32>
    %c0_6 = arith.constant 0 : index
    %c0_7 = arith.constant 0 : index
    %9 = vector.load %arg8[%c0_6, %c0_7] : memref<8x128xf32, #tpu.memory_space<vmem>>, vector<8x128xf32>
    tpu.vector_store %arg8[%c0_6, %c0_7], %8 {strides = array<i32>} : memref<8x128xf32, #tpu.memory_space<vmem>>, vector<8x128xf32>,
    %c0_i32_8 = arith.constant 0 : i32
    %10 = arith.cmpi eq, %arg1, %c0_i32_8 : i32
    %11 = arith.extui %10 : i1 to i32
    %c0_i32_9 = arith.constant 0 : i32
    %12 = arith.cmpi ne, %11, %c0_i32_9 : i32
    scf.if %12 {
      %c0_10 = arith.constant 0 : index
      %c0_11 = arith.constant 0 : index
      %13 = vector.load %arg8[%c0_10, %c0_11] : memref<8x128xf32, #tpu.memory_space<vmem>>, vector<8x128xf32>
      %c0_12 = arith.constant 0 : index
      %c0_13 = arith.constant 0 : index
      %14 = vector.load %arg4[%c0_12, %c0_13] : memref<1x128xf32, #tpu.memory_space<vmem>>, vector<1x128xf32>
      %15 = vector.broadcast %14 : vector<1x128xf32> to vector<8x128xf32>
      %16 = arith.addf %13, %15 : vector<8x128xf32>
      %cst_14 = arith.constant 0.000000e+00 : f32
      %17 = vector.broadcast %cst_14 : f32 to vector<8x128xf32>
      %18 = arith.maximumf %16, %17 : vector<8x128xf32>
      %19 = arith.truncf %18 : vector<8x128xf32> to vector<8x128xbf16>
      %c0_15 = arith.constant 0 : index
      %c0_16 = arith.constant 0 : index
      %20 = vector.load %arg5[%c0_15, %c0_16] : memref<128x128xbf16, #tpu.memory_space<vmem>>, vector<128x128xbf16>
      %cst_17 = arith.constant dense<0.000000e+00> : vector<8x128xf32>
      %21 = tpu.matmul %19, %20, %cst_17 {dimension_numbers = #tpu.dot_dimension_numbers<[1], [0], [0], [1], [0, 0, 1, 1], [], []>} : vector<8x128xbf16>, vector<128x128xbf16>, vector<8x128xf32> -> vector<8x128xf32>
      %c0_18 = arith.constant 0 : index
      %c0_19 = arith.constant 0 : index
      %22 = vector.load %arg6[%c0_18, %c0_19] : memref<1x128xf32, #tpu.memory_space<vmem>>, vector<1x128xf32>
      %23 = vector.broadcast %22 : vector<1x128xf32> to vector<8x128xf32>
      %24 = arith.addf %21, %23 : vector<8x128xf32>
      %c0_20 = arith.constant 0 : index
      %c0_21 = arith.constant 0 : index
      %25 = vector.load %arg7[%c0_20, %c0_21] : memref<8x128xf32, #tpu.memory_space<vmem>>, vector<8x128xf32>
      tpu.vector_store %arg7[%c0_20, %c0_21], %24 {strides = array<i32>} : memref<8x128xf32, #tpu.memory_space<vmem>>, vector<8x128xf32>,
    } else {
    }
    return
  }
  func.func @transform_0(%arg0: i32, %arg1: i32) -> (i32, i32) {
    %c0_i32 = arith.constant 0 : i32
    return %arg0, %arg1 : i32, i32
  }
  func.func @transform_1(%arg0: i32, %arg1: i32) -> (i32, i32) {
    %c0_i32 = arith.constant 0 : i32
    %c0_i32_0 = arith.constant 0 : i32
    return %arg1, %c0_i32 : i32, i32
  }
  func.func @transform_2(%arg0: i32, %arg1: i32) -> (i32, i32) {
    %c0_i32 = arith.constant 0 : i32
    %c0_i32_0 = arith.constant 0 : i32
    %c0_i32_1 = arith.constant 0 : i32
    return %c0_i32, %c0_i32_0 : i32, i32
  }
  func.func @transform_3(%arg0: i32, %arg1: i32) -> (i32, i32) {
    %c0_i32 = arith.constant 0 : i32
    %c0_i32_0 = arith.constant 0 : i32
    %c0_i32_1 = arith.constant 0 : i32
    return %c0_i32, %c0_i32_0 : i32, i32
  }
  func.func @transform_4(%arg0: i32, %arg1: i32) -> (i32, i32) {
    %c0_i32 = arith.constant 0 : i32
    %c0_i32_0 = arith.constant 0 : i32
    %c0_i32_1 = arith.constant 0 : i32
    return %c0_i32, %c0_i32_0 : i32, i32
  }
  func.func @transform_5(%arg0: i32, %arg1: i32) -> (i32, i32) {
    %c0_i32 = arith.constant 0 : i32
    %c0_i32_0 = arith.constant 0 : i32
    return %arg0, %c0_i32 : i32, i32
  }
}

module attributes {stable_mosaic.version = 11 : i64} {
  func.func @_alex_head_kernel(%arg0: i32, %arg1: i32, %arg2: memref<8x128xf32, #tpu.memory_space<vmem>>, %arg3: memref<128x128xbf16, #tpu.memory_space<vmem>>, %arg4: memref<1x128xf32, #tpu.memory_space<vmem>>, %arg5: memref<128x128xbf16, #tpu.memory_space<vmem>>, %arg6: memref<1x128xf32, #tpu.memory_space<vmem>>, %arg7: memref<8x128xf32, #tpu.memory_space<vmem>>, %arg8: memref<8x128xf32, #tpu.memory_space<vmem>>) attributes {dimension_semantics = [#tpu.dimension_semantics<parallel>, #tpu.dimension_semantics<arbitrary>], iteration_bounds = array<i64: 1, 1>, scalar_prefetch = 0 : i64, scratch_operands = 1 : i64, tpu.core_type = #tpu.core_type<tc>, window_params = [{transform_indices = @transform_0, window_bounds = array<i64: 8, 128>}, {transform_indices = @transform_1, window_bounds = array<i64: 128, 128>}, {pipeline_mode = #tpu.pipeline_mode<synchronous>, transform_indices = @transform_2, window_bounds = array<i64: 1, 128>}, {pipeline_mode = #tpu.pipeline_mode<synchronous>, transform_indices = @transform_3, window_bounds = array<i64: 128, 128>}, {pipeline_mode = #tpu.pipeline_mode<synchronous>, transform_indices = @transform_4, window_bounds = array<i64: 1, 128>}, {transform_indices = @transform_5, window_bounds = array<i64: 8, 128>}]} {
    %c0_i32 = arith.constant 0 : i32
    %0 = arith.cmpi eq, %arg1, %c0_i32 : i32
    %1 = arith.extui %0 : i1 to i32
    %c0_i32_0 = arith.constant 0 : i32
    %2 = arith.cmpi ne, %1, %c0_i32_0 : i32
    scf.if %2 {
      %cst_10 = arith.constant 0.000000e+00 : f32
      %13 = vector.broadcast %cst_10 : f32 to vector<8x128xf32>
      %c0_11 = arith.constant 0 : index
      %c0_12 = arith.constant 0 : index
      %14 = vector.load %arg8[%c0_11, %c0_12] : memref<8x128xf32, #tpu.memory_space<vmem>>, vector<8x128xf32>
      tpu.vector_store %arg8[%c0_11, %c0_12], %13 {strides = array<i32>} : memref<8x128xf32, #tpu.memory_space<vmem>>, vector<8x128xf32>,
    } else {
    }
    %c0 = arith.constant 0 : index
    %c0_1 = arith.constant 0 : index
    %3 = vector.load %arg8[%c0, %c0_1] : memref<8x128xf32, #tpu.memory_space<vmem>>, vector<8x128xf32>
    %c0_2 = arith.constant 0 : index
    %c0_3 = arith.constant 0 : index
    %4 = vector.load %arg2[%c0_2, %c0_3] : memref<8x128xf32, #tpu.memory_space<vmem>>, vector<8x128xf32>
    %5 = arith.truncf %4 : vector<8x128xf32> to vector<8x128xbf16>
    %c0_4 = arith.constant 0 : index
    %c0_5 = arith.constant 0 : index
    %6 = vector.load %arg3[%c0_4, %c0_5] : memref<128x128xbf16, #tpu.memory_space<vmem>>, vector<128x128xbf16>
    %cst = arith.constant dense<0.000000e+00> : vector<8x128xf32>
    %7 = tpu.matmul %5, %6, %cst {dimension_numbers = #tpu.dot_dimension_numbers<[1], [0], [0], [1], [0, 0, 1, 1], [], []>} : vector<8x128xbf16>, vector<128x128xbf16>, vector<8x128xf32> -> vector<8x128xf32>
    %8 = arith.addf %3, %7 : vector<8x128xf32>
    %c0_6 = arith.constant 0 : index
    %c0_7 = arith.constant 0 : index
    %9 = vector.load %arg8[%c0_6, %c0_7] : memref<8x128xf32, #tpu.memory_space<vmem>>, vector<8x128xf32>
    tpu.vector_store %arg8[%c0_6, %c0_7], %8 {strides = array<i32>} : memref<8x128xf32, #tpu.memory_space<vmem>>, vector<8x128xf32>,
    %c0_i32_8 = arith.constant 0 : i32
    %10 = arith.cmpi eq, %arg1, %c0_i32_8 : i32
    %11 = arith.extui %10 : i1 to i32
    %c0_i32_9 = arith.constant 0 : i32
    %12 = arith.cmpi ne, %11, %c0_i32_9 : i32
    scf.if %12 {
      %c0_10 = arith.constant 0 : index
      %c0_11 = arith.constant 0 : index
      %13 = vector.load %arg8[%c0_10, %c0_11] : memref<8x128xf32, #tpu.memory_space<vmem>>, vector<8x128xf32>
      %c0_12 = arith.constant 0 : index
      %c0_13 = arith.constant 0 : index
      %14 = vector.load %arg4[%c0_12, %c0_13] : memref<1x128xf32, #tpu.memory_space<vmem>>, vector<1x128xf32>
      %15 = vector.broadcast %14 : vector<1x128xf32> to vector<8x128xf32>
      %16 = arith.addf %13, %15 : vector<8x128xf32>
      %cst_14 = arith.constant 0.000000e+00 : f32
      %17 = vector.broadcast %cst_14 : f32 to vector<8x128xf32>
      %18 = arith.maximumf %16, %17 : vector<8x128xf32>
      %19 = arith.truncf %18 : vector<8x128xf32> to vector<8x128xbf16>
      %c0_15 = arith.constant 0 : index
      %c0_16 = arith.constant 0 : index
      %20 = vector.load %arg5[%c0_15, %c0_16] : memref<128x128xbf16, #tpu.memory_space<vmem>>, vector<128x128xbf16>
      %cst_17 = arith.constant dense<0.000000e+00> : vector<8x128xf32>
      %21 = tpu.matmul %19, %20, %cst_17 {dimension_numbers = #tpu.dot_dimension_numbers<[1], [0], [0], [1], [0, 0, 1, 1], [], []>} : vector<8x128xbf16>, vector<128x128xbf16>, vector<8x128xf32> -> vector<8x128xf32>
      %c0_18 = arith.constant 0 : index
      %c0_19 = arith.constant 0 : index
      %22 = vector.load %arg6[%c0_18, %c0_19] : memref<1x128xf32, #tpu.memory_space<vmem>>, vector<1x128xf32>
      %23 = vector.broadcast %22 : vector<1x128xf32> to vector<8x128xf32>
      %24 = arith.addf %21, %23 : vector<8x128xf32>
      %c0_20 = arith.constant 0 : index
      %c0_21 = arith.constant 0 : index
      %25 = vector.load %arg7[%c0_20, %c0_21] : memref<8x128xf32, #tpu.memory_space<vmem>>, vector<8x128xf32>
      tpu.vector_store %arg7[%c0_20, %c0_21], %24 {strides = array<i32>} : memref<8x128xf32, #tpu.memory_space<vmem>>, vector<8x128xf32>,
    } else {
    }
    return
  }
  func.func @transform_0(%arg0: i32, %arg1: i32) -> (i32, i32) {
    %c0_i32 = arith.constant 0 : i32
    return %arg0, %arg1 : i32, i32
  }
  func.func @transform_1(%arg0: i32, %arg1: i32) -> (i32, i32) {
    %c0_i32 = arith.constant 0 : i32
    %c0_i32_0 = arith.constant 0 : i32
    return %arg1, %c0_i32 : i32, i32
  }
  func.func @transform_2(%arg0: i32, %arg1: i32) -> (i32, i32) {
    %c0_i32 = arith.constant 0 : i32
    %c0_i32_0 = arith.constant 0 : i32
    %c0_i32_1 = arith.constant 0 : i32
    return %c0_i32, %c0_i32_0 : i32, i32
  }
  func.func @transform_3(%arg0: i32, %arg1: i32) -> (i32, i32) {
    %c0_i32 = arith.constant 0 : i32
    %c0_i32_0 = arith.constant 0 : i32
    %c0_i32_1 = arith.constant 0 : i32
    return %c0_i32, %c0_i32_0 : i32, i32
  }
  func.func @transform_4(%arg0: i32, %arg1: i32) -> (i32, i32) {
    %c0_i32 = arith.constant 0 : i32
    %c0_i32_0 = arith.constant 0 : i32
    %c0_i32_1 = arith.constant 0 : i32
    return %c0_i32, %c0_i32_0 : i32, i32
  }
  func.func @transform_5(%arg0: i32, %arg1: i32) -> (i32, i32) {
    %c0_i32 = arith.constant 0 : i32
    %c0_i32_0 = arith.constant 0 : i32
    return %arg0, %c0_i32 : i32, i32
  }
}

</mosaic_0001>

<llo_original>
// kernel: tpu_custom_call.1
$region0: #{tpu_custom_call.1}
  #allocation0 [shape = 'u32[]', space=smem, size = 0x4, offset = 0x4, fixed_abs, tag = 'smem constant byte address 0x4 - core index']
  #allocation1 [shape = 'u32[144,128]{1,0:T(1,128)}', space=vmem, size = 0x12000, scoped, tag = 'internal scratch']
  #allocation2 [shape = 'f32[8,128]{1,0:T(8,128)}', space=vmem, size = 0x1000, scoped, tag = 'scratch operand']
  %s0 = inlined_call_operand.hbm [shape: f32[8,128], index: 0, kind: input, shape index: {}]
  %s1 = inlined_call_operand.hbm [shape: bf16[128,128], index: 1, kind: input, shape index: {}]
  %s2 = inlined_call_operand.hbm [shape: f32[1,128], index: 2, kind: input, shape index: {}]
  %s3 = inlined_call_operand.hbm [shape: bf16[128,128], index: 3, kind: input, shape index: {}]
  %s4 = inlined_call_operand.hbm [shape: f32[1,128], index: 4, kind: input, shape index: {}]
  %s5 = inlined_call_operand.hbm [shape: f32[8,128], index: 5, kind: output, shape index: {}]
  %s6 = sld [smem:[#allocation0]]
  $region58: #{tpu_custom_call.1} parent=0
    _
  %s8 = ssub.s32 1, %s6
  %s9 = scalar_select 0, %s8, %s6
  $region1: #{tpu_custom_call.1} parent=0
    #allocation3 [shape = 'u8[4096]{0}', space=vmem, size = 0x1000, scoped, tag = 'input window, operand 0, single buffered']
    #allocation4 [shape = 's32[1]{0}', space=sflag, size = 0x4, scoped, tag = 'scoped memory for tpu_custom_call.1']
    #allocation5 [shape = 's32[1]{0}', space=sflag, size = 0x4, scoped, tag = 'scoped memory for tpu_custom_call.1']
    #allocation6 [shape = 'u8[32768]{0}', space=vmem, size = 0x8000, scoped, tag = 'input window, operand 1, single buffered']
    #allocation7 [shape = 's32[1]{0}', space=sflag, size = 0x4, scoped, tag = 'scoped memory for tpu_custom_call.1']
    #allocation8 [shape = 'u8[512]{0}', space=vmem, size = 0x400, scoped, tag = 'input window, operand 2, single buffered']
    #allocation9 [shape = 'u8[32768]{0}', space=vmem, size = 0x8000, scoped, tag = 'input window, operand 3, single buffered']
    #allocation10 [shape = 's32[1]{0}', space=sflag, size = 0x4, scoped, tag = 'scoped memory for tpu_custom_call.1']
    #allocation11 [shape = 'u8[512]{0}', space=vmem, size = 0x400, scoped, tag = 'input window, operand 4, single buffered']
    #allocation12 [shape = 'u8[4096]{0}', space=vmem, size = 0x1000, scoped, tag = 'output window, operand 0, single buffered']
    %10 = vsyncpa [#allocation4], 0
    %11 = vsyncpa [#allocation7], 0
    %12 = vsyncpa [#allocation10], 0
    %13 = vsyncpa [#allocation5], 0
    // Predicated region
    $region2: #{tpu_custom_call.1} parent=1 // pred_check
      _
    $region3: #{tpu_custom_call.1} parent=1 // pred_check_branch
      %15 = sbr.rel (0) target = $region5
    $region4: #{tpu_custom_call.1} parent=1 // pred_region
      %s17 = ssub.s32 128, 128
      %18 = vsyncadd [#allocation4], %s17
      %s20 = sshll.u32 [#allocation3], 4
      %s21 = int_to_ptr.vmem [resolvable:$true] %s20
      %23 = dma.hbm_to_vmem [thread:$0]  %s0, 128, %s21, [#allocation4]
    $region5: #{tpu_custom_call.1} parent=1 // pred_fallthru
      _
    // Predicated region
    $region6: #{tpu_custom_call.1} parent=1 // pred_check
      _
    $region7: #{tpu_custom_call.1} parent=1 // pred_check_branch
      %25 = sbr.rel (0) target = $region9
    $region8: #{tpu_custom_call.1} parent=1 // pred_region
      %s27 = ssub.s32 1024, 1024
      %28 = vsyncadd [#allocation7], %s27
      %s29 = sshll.u32 [#allocation6], 4
      %s30 = int_to_ptr.vmem [resolvable:$true] %s29
      %35 = dma.hbm_to_vmem [thread:$0]  %s1, 1024, %s30, [#allocation7], 64, 64, 4
    $region9: #{tpu_custom_call.1} parent=1 // pred_fallthru
      _
    // Predicated region
    $region10: #{tpu_custom_call.1} parent=1 // pred_check
      _
    $region11: #{tpu_custom_call.1} parent=1 // pred_check_branch
      %37 = sbr.rel (0) target = $region13
    $region12: #{tpu_custom_call.1} parent=1 // pred_region
      %s39 = ssub.s32 16, 16
      %40 = vsyncadd [#allocation7], %s39
      %s42 = sshll.u32 [#allocation8], 4
      %s43 = int_to_ptr.vmem [resolvable:$true] %s42
      %45 = dma.hbm_to_vmem [thread:$0]  %s2, 16, %s43, [#allocation7]
    $region13: #{tpu_custom_call.1} parent=1 // pred_fallthru
      _
    // Predicated region
    $region14: #{tpu_custom_call.1} parent=1 // pred_check
      _
    $region15: #{tpu_custom_call.1} parent=1 // pred_check_branch
      %47 = sbr.rel (0) target = $region17
    $region16: #{tpu_custom_call.1} parent=1 // pred_region
      %s49 = ssub.s32 1024, 1024
      %50 = vsyncadd [#allocation10], %s49
      %s51 = sshll.u32 [#allocation9], 4
      %s52 = int_to_ptr.vmem [resolvable:$true] %s51
      %57 = dma.hbm_to_vmem [thread:$0]  %s3, 1024, %s52, [#allocation10], 64, 64, 4
    $region17: #{tpu_custom_call.1} parent=1 // pred_fallthru
      _
    // Predicated region
    $region18: #{tpu_custom_call.1} parent=1 // pred_check
      _
    $region19: #{tpu_custom_call.1} parent=1 // pred_check_branch
      %59 = sbr.rel (0) target = $region21
    $region20: #{tpu_custom_call.1} parent=1 // pred_region
      %s61 = ssub.s32 16, 16
      %62 = vsyncadd [#allocation10], %s61
      %s64 = sshll.u32 [#allocation11], 4
      %s65 = int_to_ptr.vmem [resolvable:$true] %s64
      %67 = dma.hbm_to_vmem [thread:$0]  %s4, 16, %s65, [#allocation10]
    $region21: #{tpu_custom_call.1} parent=1 // pred_fallthru
      _
    // Predicated region
    $region22: #{tpu_custom_call.1} parent=1 // pred_check
      _
    $region23: #{tpu_custom_call.1} parent=1 // pred_check_branch
      %69 = sbr.rel (0) target = $region25
    $region24: #{tpu_custom_call.1} parent=1 // pred_region
      %70 = dma.done [#allocation4], 128
    $region25: #{tpu_custom_call.1} parent=1 // pred_fallthru
      _
    // Predicated region
    $region26: #{tpu_custom_call.1} parent=1 // pred_check
      _
    $region27: #{tpu_custom_call.1} parent=1 // pred_check_branch
      %72 = sbr.rel (0) target = $region29
    $region28: #{tpu_custom_call.1} parent=1 // pred_region
      %73 = dma.done [#allocation7], 1024
    $region29: #{tpu_custom_call.1} parent=1 // pred_fallthru
      _
    // Predicated region
    $region30: #{tpu_custom_call.1} parent=1 // pred_check
      _
    $region31: #{tpu_custom_call.1} parent=1 // pred_check_branch
      %75 = sbr.rel (0) target = $region33
    $region32: #{tpu_custom_call.1} parent=1 // pred_region
      %76 = dma.done [#allocation7], 16
    $region33: #{tpu_custom_call.1} parent=1 // pred_fallthru
      _
    // Predicated region
    $region34: #{tpu_custom_call.1} parent=1 // pred_check
      _
    $region35: #{tpu_custom_call.1} parent=1 // pred_check_branch
      %78 = sbr.rel (0) target = $region37
    $region36: #{tpu_custom_call.1} parent=1 // pred_region
      %79 = dma.done [#allocation10], 1024
    $region37: #{tpu_custom_call.1} parent=1 // pred_fallthru
      _
    // Predicated region
    $region38: #{tpu_custom_call.1} parent=1 // pred_check
      _
    $region39: #{tpu_custom_call.1} parent=1 // pred_check_branch
      %81 = sbr.rel (0) target = $region41
    $region40: #{tpu_custom_call.1} parent=1 // pred_region
      %82 = dma.done [#allocation10], 16
    $region41: #{tpu_custom_call.1} parent=1 // pred_fallthru
      _
    %p84 = scmp.eq.s32.totalorder 0, 0
    // Predicated region
    $region42: #{tpu_custom_call.1} parent=1 // pred_check
      %p85 = pneg %p84
    $region43: #{tpu_custom_call.1} parent=1 // pred_check_branch
      %87 = sbr.rel (%p85) target = $region45
    $region44: #{tpu_custom_call.1} parent=1 // pred_region
      %88 = vst [vmem:[#allocation2] sm:$0xff] 0.0
    $region45: #{tpu_custom_call.1} parent=1 // pred_fallthru
      _
    %v89 = vld [vmem:[#allocation2] sm:$0xff]
    %v90 = vld [vmem:[#allocation3] sm:$0xff]
    %v91 = vpack.c.bf16 %v90, %v90
    %v92 = vld [vmem:[#allocation6] sm:$0xf]
    %v93 = vld [vmem:[#allocation6 + $0x4] sm:$0xf]
    %v94 = vld [vmem:[#allocation6 + $0x8] sm:$0xf]
    %v95 = vld [vmem:[#allocation6 + $0xc] sm:$0xf]
    %v96 = vld [vmem:[#allocation6 + $0x10] sm:$0xf]
    %v97 = vld [vmem:[#allocation6 + $0x14] sm:$0xf]
    %v98 = vld [vmem:[#allocation6 + $0x18] sm:$0xf]
    %v99 = vld [vmem:[#allocation6 + $0x1c] sm:$0xf]
    %v100 = vld [vmem:[#allocation6 + $0x20] sm:$0xf]
    %v101 = vld [vmem:[#allocation6 + $0x24] sm:$0xf]
    %v102 = vld [vmem:[#allocation6 + $0x28] sm:$0xf]
    %v103 = vld [vmem:[#allocation6 + $0x2c] sm:$0xf]
    %v104 = vld [vmem:[#allocation6 + $0x30] sm:$0xf]
    %v105 = vld [vmem:[#allocation6 + $0x34] sm:$0xf]
    %v106 = vld [vmem:[#allocation6 + $0x38] sm:$0xf]
    %v107 = vld [vmem:[#allocation6 + $0x3c] sm:$0xf]
    %v124 = vunpack.c.l.b16 %v92
    %v125 = vunpack.c.l.b16 %v93
    %v126 = vunpack.c.l.b16 %v94
    %v127 = vunpack.c.l.b16 %v95
    %v128 = vunpack.c.l.b16 %v96
    %v129 = vunpack.c.l.b16 %v97
    %v130 = vunpack.c.l.b16 %v98
    %v131 = vunpack.c.l.b16 %v99
    %v132 = vunpack.c.l.b16 %v100
    %v133 = vunpack.c.l.b16 %v101
    %v134 = vunpack.c.l.b16 %v102
    %v135 = vunpack.c.l.b16 %v103
    %v136 = vunpack.c.l.b16 %v104
    %v137 = vunpack.c.l.b16 %v105
    %v138 = vunpack.c.l.b16 %v106
    %v139 = vunpack.c.l.b16 %v107
    %v140 = vpack.c.b16 %v125, %v124
    %v141 = vpack.c.b16 %v127, %v126
    %v142 = vpack.c.b16 %v129, %v128
    %v143 = vpack.c.b16 %v131, %v130
    %v144 = vpack.c.b16 %v133, %v132
    %v145 = vpack.c.b16 %v135, %v134
    %v146 = vpack.c.b16 %v137, %v136
    %v147 = vpack.c.b16 %v139, %v138
    %156 = vmatprep.subr.bf16.mxu0 0
    %157 = vmatpush1.bf16.msra.mxu0 %v140
    %158 = vmatprep.subr.bf16.mxu0 0
    %159 = vmatpush1.bf16.msra.mxu0 %v141
    %160 = vmatprep.subr.bf16.mxu0 0
    %161 = vmatpush1.bf16.msra.mxu0 %v142
    %162 = vmatprep.subr.bf16.mxu0 0
    %163 = vmatpush1.bf16.msra.mxu0 %v143
    %164 = vmatprep.subr.bf16.mxu0 0
    %165 = vmatpush1.bf16.msra.mxu0 %v144
    %166 = vmatprep.subr.bf16.mxu0 0
    %167 = vmatpush1.bf16.msra.mxu0 %v145
    %168 = vmatprep.subr.bf16.mxu0 0
    %169 = vmatpush1.bf16.msra.mxu0 %v146
    %170 = vmatprep.subr.bf16.mxu0 0
    %171 = vmatpush1.bf16.msra.mxu0 %v147
    %172 = vmatprep.subr.bf16.mxu0 0
    %173 = vmatpush1.bf16.msra.mxu0 0
    %174 = vmatprep.subr.bf16.mxu0 0
    %175 = vmatpush1.bf16.msra.mxu0 0
    %176 = vmatprep.subr.bf16.mxu0 0
    %177 = vmatpush1.bf16.msra.mxu0 0
    %178 = vmatprep.subr.bf16.mxu0 0
    %179 = vmatpush1.bf16.msra.mxu0 0
    %180 = vmatprep.subr.bf16.mxu0 0
    %181 = vmatpush1.bf16.msra.mxu0 0
    %182 = vmatprep.subr.bf16.mxu0 0
    %183 = vmatpush1.bf16.msra.mxu0 0
    %184 = vmatprep.subr.bf16.mxu0 0
    %185 = vmatpush1.bf16.msra.mxu0 0
    %186 = vmatprep.subr.bf16.mxu0 0
    %187 = vmatpush1.bf16.msra.mxu0 0
    %188 = vmatprep.mubr.bf16.mxu0 0
    %189 = vmatmul.mubr.bf16.gmra.mrb[0].mxu0 %v91
    %v190 = vpop.f32.mrb[0].mxu0
    %v191 = vadd.f32 0.0, %v190
    %v192 = vpop.f32.mrb[0].mxu0
    %v193 = vpop.f32.mrb[0].mxu0
    %v194 = vpop.f32.mrb[0].mxu0
    %195 = vdwg.mxu0
    %v196 = vadd.f32 %v89, %v191
    %197 = vst [vmem:[#allocation2] sm:$0xff] %v196
    // Predicated region
    $region46: #{tpu_custom_call.1} parent=1 // pred_check
      %p198 = pneg %p84
    $region47: #{tpu_custom_call.1} parent=1 // pred_check_branch
      %200 = sbr.rel (%p198) target = $region49
    $region48: #{tpu_custom_call.1} parent=1 // pred_region
      %v201 = vld [vmem:[#allocation2] sm:$0xff]
      %v202 = vld [vmem:[#allocation8] sm:$0x1]
      %v204 = vlaneseq
      %v205 = vshrl.u32 %v204, 7
      %v206 = vsub.s32 0, %v205
      %v207 = vrot.slane %v202, %v206
      %v209 = vadd.f32 %v201, %v207
      %v210 = vmax.f32 %v209, 0.0
      %v211 = vpack.c.bf16 %v210, %v210
      %v212 = vld [vmem:[#allocation9] sm:$0xf]
      %v213 = vld [vmem:[#allocation9 + $0x4] sm:$0xf]
      %v214 = vld [vmem:[#allocation9 + $0x8] sm:$0xf]
      %v215 = vld [vmem:[#allocation9 + $0xc] sm:$0xf]
      %v216 = vld [vmem:[#allocation9 + $0x10] sm:$0xf]
      %v217 = vld [vmem:[#allocation9 + $0x14] sm:$0xf]
      %v218 = vld [vmem:[#allocation9 + $0x18] sm:$0xf]
      %v219 = vld [vmem:[#allocation9 + $0x1c] sm:$0xf]
      %v220 = vld [vmem:[#allocation9 + $0x20] sm:$0xf]
      %v221 = vld [vmem:[#allocation9 + $0x24] sm:$0xf]
      %v222 = vld [vmem:[#allocation9 + $0x28] sm:$0xf]
      %v223 = vld [vmem:[#allocation9 + $0x2c] sm:$0xf]
      %v224 = vld [vmem:[#allocation9 + $0x30] sm:$0xf]
      %v225 = vld [vmem:[#allocation9 + $0x34] sm:$0xf]
      %v226 = vld [vmem:[#allocation9 + $0x38] sm:$0xf]
      %v227 = vld [vmem:[#allocation9 + $0x3c] sm:$0xf]
      %v228 = vld [vmem:[#allocation11] sm:$0x1]
      %v230 = vlaneseq
      %v231 = vshrl.u32 %v230, 7
      %v232 = vsub.s32 0, %v231
      %v233 = vrot.slane %v228, %v232
      %v251 = vunpack.c.l.b16 %v212
      %v252 = vunpack.c.l.b16 %v213
      %v253 = vunpack.c.l.b16 %v214
      %v254 = vunpack.c.l.b16 %v215
      %v255 = vunpack.c.l.b16 %v216
      %v256 = vunpack.c.l.b16 %v217
      %v257 = vunpack.c.l.b16 %v218
      %v258 = vunpack.c.l.b16 %v219
      %v259 = vunpack.c.l.b16 %v220
      %v260 = vunpack.c.l.b16 %v221
      %v261 = vunpack.c.l.b16 %v222
      %v262 = vunpack.c.l.b16 %v223
      %v263 = vunpack.c.l.b16 %v224
      %v264 = vunpack.c.l.b16 %v225
      %v265 = vunpack.c.l.b16 %v226
      %v266 = vunpack.c.l.b16 %v227
      %v267 = vpack.c.b16 %v252, %v251
      %v268 = vpack.c.b16 %v254, %v253
      %v269 = vpack.c.b16 %v256, %v255
      %v270 = vpack.c.b16 %v258, %v257
      %v271 = vpack.c.b16 %v260, %v259
      %v272 = vpack.c.b16 %v262, %v261
      %v273 = vpack.c.b16 %v264, %v263
      %v274 = vpack.c.b16 %v266, %v265
      %283 = vmatprep.subr.bf16.mxu0 0
      %284 = vmatpush1.bf16.msra.mxu0 %v267
      %285 = vmatprep.subr.bf16.mxu0 0
      %286 = vmatpush1.bf16.msra.mxu0 %v268
      %287 = vmatprep.subr.bf16.mxu0 0
      %288 = vmatpush1.bf16.msra.mxu0 %v269
      %289 = vmatprep.subr.bf16.mxu0 0
      %290 = vmatpush1.bf16.msra.mxu0 %v270
      %291 = vmatprep.subr.bf16.mxu0 0
      %292 = vmatpush1.bf16.msra.mxu0 %v271
      %293 = vmatprep.subr.bf16.mxu0 0
      %294 = vmatpush1.bf16.msra.mxu0 %v272
      %295 = vmatprep.subr.bf16.mxu0 0
      %296 = vmatpush1.bf16.msra.mxu0 %v273
      %297 = vmatprep.subr.bf16.mxu0 0
      %298 = vmatpush1.bf16.msra.mxu0 %v274
      %299 = vmatprep.subr.bf16.mxu0 0
      %300 = vmatpush1.bf16.msra.mxu0 0
      %301 = vmatprep.subr.bf16.mxu0 0
      %302 = vmatpush1.bf16.msra.mxu0 0
      %303 = vmatprep.subr.bf16.mxu0 0
      %304 = vmatpush1.bf16.msra.mxu0 0
      %305 = vmatprep.subr.bf16.mxu0 0
      %306 = vmatpush1.bf16.msra.mxu0 0
      %307 = vmatprep.subr.bf16.mxu0 0
      %308 = vmatpush1.bf16.msra.mxu0 0
      %309 = vmatprep.subr.bf16.mxu0 0
      %310 = vmatpush1.bf16.msra.mxu0 0
      %311 = vmatprep.subr.bf16.mxu0 0
      %312 = vmatpush1.bf16.msra.mxu0 0
      %313 = vmatprep.subr.bf16.mxu0 0
      %314 = vmatpush1.bf16.msra.mxu0 0
      %315 = vmatprep.mubr.bf16.mxu0 0
      %316 = vmatmul.mubr.bf16.gmra.mrb[0].mxu0 %v211
      %v317 = vpop.f32.mrb[0].mxu0
      %v318 = vadd.f32 %v233, %v317
      %v319 = vpop.f32.mrb[0].mxu0
      %v320 = vpop.f32.mrb[0].mxu0
      %v321 = vpop.f32.mrb[0].mxu0
      %322 = vdwg.mxu0
      %323 = vst [vmem:[#allocation12] sm:$0xff] %v318
    $region49: #{tpu_custom_call.1} parent=1 // pred_fallthru
      _
    // Predicated region
    $region50: #{tpu_custom_call.1} parent=1 // pred_check
      _
    $region51: #{tpu_custom_call.1} parent=1 // pred_check_branch
      %325 = sbr.rel (0) target = $region53
    $region52: #{tpu_custom_call.1} parent=1 // pred_region
      %s327 = ssub.s32 128, 128
      %328 = vsyncadd [#allocation5], %s327
      %s330 = sshll.u32 [#allocation12], 4
      %s331 = int_to_ptr.vmem [resolvable:$true] %s330
      %333 = dma.vmem_to_hbm [thread:$0]  %s331, 128, %s5, [#allocation5]
    $region53: #{tpu_custom_call.1} parent=1 // pred_fallthru
      _
    // Predicated region
    $region54: #{tpu_custom_call.1} parent=1 // pred_check
      _
    $region55: #{tpu_custom_call.1} parent=1 // pred_check_branch
      %335 = sbr.rel (0) target = $region57
    $region56: #{tpu_custom_call.1} parent=1 // pred_region
      %336 = dma.done [#allocation5], 128
    $region57: #{tpu_custom_call.1} parent=1 // pred_fallthru
      _
    %337 = vsyncpa [#allocation4], 1
    %338 = vsyncpa [#allocation7], 1
    %339 = vsyncpa [#allocation10], 1
    %340 = vsyncpa [#allocation5], 1

// kernel: tpu_custom_call.1
$region0: #{tpu_custom_call.1}
  #allocation0 [shape = 'u32[]', space=smem, size = 0x4, offset = 0x4, fixed_abs, tag = 'smem constant byte address 0x4 - core index']
  #allocation1 [shape = 'u32[144,128]{1,0:T(1,128)}', space=vmem, size = 0x12000, scoped, tag = 'internal scratch']
  #allocation2 [shape = 'f32[8,128]{1,0:T(8,128)}', space=vmem, size = 0x1000, scoped, tag = 'scratch operand']
  %s0 = inlined_call_operand.hbm [shape: f32[8,128], index: 0, kind: input, shape index: {}]
  %s1 = inlined_call_operand.hbm [shape: bf16[128,128], index: 1, kind: input, shape index: {}]
  %s2 = inlined_call_operand.hbm [shape: f32[1,128], index: 2, kind: input, shape index: {}]
  %s3 = inlined_call_operand.hbm [shape: bf16[128,128], index: 3, kind: input, shape index: {}]
  %s4 = inlined_call_operand.hbm [shape: f32[1,128], index: 4, kind: input, shape index: {}]
  %s5 = inlined_call_operand.hbm [shape: f32[8,128], index: 5, kind: output, shape index: {}]
  %s6 = sld [smem:[#allocation0]]
  $region58: #{tpu_custom_call.1} parent=0
    _
  %s8 = ssub.s32 1, %s6
  %s9 = scalar_select 0, %s8, %s6
  $region1: #{tpu_custom_call.1} parent=0
    #allocation3 [shape = 'u8[4096]{0}', space=vmem, size = 0x1000, scoped, tag = 'input window, operand 0, single buffered']
    #allocation4 [shape = 's32[1]{0}', space=sflag, size = 0x4, scoped, tag = 'scoped memory for tpu_custom_call.1']
    #allocation5 [shape = 's32[1]{0}', space=sflag, size = 0x4, scoped, tag = 'scoped memory for tpu_custom_call.1']
    #allocation6 [shape = 'u8[32768]{0}', space=vmem, size = 0x8000, scoped, tag = 'input window, operand 1, single buffered']
    #allocation7 [shape = 's32[1]{0}', space=sflag, size = 0x4, scoped, tag = 'scoped memory for tpu_custom_call.1']
    #allocation8 [shape = 'u8[512]{0}', space=vmem, size = 0x400, scoped, tag = 'input window, operand 2, single buffered']
    #allocation9 [shape = 'u8[32768]{0}', space=vmem, size = 0x8000, scoped, tag = 'input window, operand 3, single buffered']
    #allocation10 [shape = 's32[1]{0}', space=sflag, size = 0x4, scoped, tag = 'scoped memory for tpu_custom_call.1']
    #allocation11 [shape = 'u8[512]{0}', space=vmem, size = 0x400, scoped, tag = 'input window, operand 4, single buffered']
    #allocation12 [shape = 'u8[4096]{0}', space=vmem, size = 0x1000, scoped, tag = 'output window, operand 0, single buffered']
    %10 = vsyncpa [#allocation4], 0
    %11 = vsyncpa [#allocation7], 0
    %12 = vsyncpa [#allocation10], 0
    %13 = vsyncpa [#allocation5], 0
    // Predicated region
    $region2: #{tpu_custom_call.1} parent=1 // pred_check
      _
    $region3: #{tpu_custom_call.1} parent=1 // pred_check_branch
      %15 = sbr.rel (0) target = $region5
    $region4: #{tpu_custom_call.1} parent=1 // pred_region
      %s17 = ssub.s32 128, 128
      %18 = vsyncadd [#allocation4], %s17
      %s20 = sshll.u32 [#allocation3], 4
      %s21 = int_to_ptr.vmem [resolvable:$true] %s20
      %23 = dma.hbm_to_vmem [thread:$0]  %s0, 128, %s21, [#allocation4]
    $region5: #{tpu_custom_call.1} parent=1 // pred_fallthru
      _
    // Predicated region
    $region6: #{tpu_custom_call.1} parent=1 // pred_check
      _
    $region7: #{tpu_custom_call.1} parent=1 // pred_check_branch
      %25 = sbr.rel (0) target = $region9
    $region8: #{tpu_custom_call.1} parent=1 // pred_region
      %s27 = ssub.s32 1024, 1024
      %28 = vsyncadd [#allocation7], %s27
      %s29 = sshll.u32 [#allocation6], 4
      %s30 = int_to_ptr.vmem [resolvable:$true] %s29
      %35 = dma.hbm_to_vmem [thread:$0]  %s1, 1024, %s30, [#allocation7], 64, 64, 4
    $region9: #{tpu_custom_call.1} parent=1 // pred_fallthru
      _
    // Predicated region
    $region10: #{tpu_custom_call.1} parent=1 // pred_check
      _
    $region11: #{tpu_custom_call.1} parent=1 // pred_check_branch
      %37 = sbr.rel (0) target = $region13
    $region12: #{tpu_custom_call.1} parent=1 // pred_region
      %s39 = ssub.s32 16, 16
      %40 = vsyncadd [#allocation7], %s39
      %s42 = sshll.u32 [#allocation8], 4
      %s43 = int_to_ptr.vmem [resolvable:$true] %s42
      %45 = dma.hbm_to_vmem [thread:$0]  %s2, 16, %s43, [#allocation7]
    $region13: #{tpu_custom_call.1} parent=1 // pred_fallthru
      _
    // Predicated region
    $region14: #{tpu_custom_call.1} parent=1 // pred_check
      _
    $region15: #{tpu_custom_call.1} parent=1 // pred_check_branch
      %47 = sbr.rel (0) target = $region17
    $region16: #{tpu_custom_call.1} parent=1 // pred_region
      %s49 = ssub.s32 1024, 1024
      %50 = vsyncadd [#allocation10], %s49
      %s51 = sshll.u32 [#allocation9], 4
      %s52 = int_to_ptr.vmem [resolvable:$true] %s51
      %57 = dma.hbm_to_vmem [thread:$0]  %s3, 1024, %s52, [#allocation10], 64, 64, 4
    $region17: #{tpu_custom_call.1} parent=1 // pred_fallthru
      _
    // Predicated region
    $region18: #{tpu_custom_call.1} parent=1 // pred_check
      _
    $region19: #{tpu_custom_call.1} parent=1 // pred_check_branch
      %59 = sbr.rel (0) target = $region21
    $region20: #{tpu_custom_call.1} parent=1 // pred_region
      %s61 = ssub.s32 16, 16
      %62 = vsyncadd [#allocation10], %s61
      %s64 = sshll.u32 [#allocation11], 4
      %s65 = int_to_ptr.vmem [resolvable:$true] %s64
      %67 = dma.hbm_to_vmem [thread:$0]  %s4, 16, %s65, [#allocation10]
    $region21: #{tpu_custom_call.1} parent=1 // pred_fallthru
      _
    // Predicated region
    $region22: #{tpu_custom_call.1} parent=1 // pred_check
      _
    $region23: #{tpu_custom_call.1} parent=1 // pred_check_branch
      %69 = sbr.rel (0) target = $region25
    $region24: #{tpu_custom_call.1} parent=1 // pred_region
      %70 = dma.done [#allocation4], 128
    $region25: #{tpu_custom_call.1} parent=1 // pred_fallthru
      _
    // Predicated region
    $region26: #{tpu_custom_call.1} parent=1 // pred_check
      _
    $region27: #{tpu_custom_call.1} parent=1 // pred_check_branch
      %72 = sbr.rel (0) target = $region29
    $region28: #{tpu_custom_call.1} parent=1 // pred_region
      %73 = dma.done [#allocation7], 1024
    $region29: #{tpu_custom_call.1} parent=1 // pred_fallthru
      _
    // Predicated region
    $region30: #{tpu_custom_call.1} parent=1 // pred_check
      _
    $region31: #{tpu_custom_call.1} parent=1 // pred_check_branch
      %75 = sbr.rel (0) target = $region33
    $region32: #{tpu_custom_call.1} parent=1 // pred_region
      %76 = dma.done [#allocation7], 16
    $region33: #{tpu_custom_call.1} parent=1 // pred_fallthru
      _
    // Predicated region
    $region34: #{tpu_custom_call.1} parent=1 // pred_check
      _
    $region35: #{tpu_custom_call.1} parent=1 // pred_check_branch
      %78 = sbr.rel (0) target = $region37
    $region36: #{tpu_custom_call.1} parent=1 // pred_region
      %79 = dma.done [#allocation10], 1024
    $region37: #{tpu_custom_call.1} parent=1 // pred_fallthru
      _
    // Predicated region
    $region38: #{tpu_custom_call.1} parent=1 // pred_check
      _
    $region39: #{tpu_custom_call.1} parent=1 // pred_check_branch
      %81 = sbr.rel (0) target = $region41
    $region40: #{tpu_custom_call.1} parent=1 // pred_region
      %82 = dma.done [#allocation10], 16
    $region41: #{tpu_custom_call.1} parent=1 // pred_fallthru
      _
    %p84 = scmp.eq.s32.totalorder 0, 0
    // Predicated region
    $region42: #{tpu_custom_call.1} parent=1 // pred_check
      %p85 = pneg %p84
    $region43: #{tpu_custom_call.1} parent=1 // pred_check_branch
      %87 = sbr.rel (%p85) target = $region45
    $region44: #{tpu_custom_call.1} parent=1 // pred_region
      %88 = vst [vmem:[#allocation2] sm:$0xff] 0.0
    $region45: #{tpu_custom_call.1} parent=1 // pred_fallthru
      _
    %v89 = vld [vmem:[#allocation2] sm:$0xff]
    %v90 = vld [vmem:[#allocation3] sm:$0xff]
    %v91 = vpack.c.bf16 %v90, %v90
    %v92 = vld [vmem:[#allocation6] sm:$0xf]
    %v93 = vld [vmem:[#allocation6 + $0x4] sm:$0xf]
    %v94 = vld [vmem:[#allocation6 + $0x8] sm:$0xf]
    %v95 = vld [vmem:[#allocation6 + $0xc] sm:$0xf]
    %v96 = vld [vmem:[#allocation6 + $0x10] sm:$0xf]
    %v97 = vld [vmem:[#allocation6 + $0x14] sm:$0xf]
    %v98 = vld [vmem:[#allocation6 + $0x18] sm:$0xf]
    %v99 = vld [vmem:[#allocation6 + $0x1c] sm:$0xf]
    %v100 = vld [vmem:[#allocation6 + $0x20] sm:$0xf]
    %v101 = vld [vmem:[#allocation6 + $0x24] sm:$0xf]
    %v102 = vld [vmem:[#allocation6 + $0x28] sm:$0xf]
    %v103 = vld [vmem:[#allocation6 + $0x2c] sm:$0xf]
    %v104 = vld [vmem:[#allocation6 + $0x30] sm:$0xf]
    %v105 = vld [vmem:[#allocation6 + $0x34] sm:$0xf]
    %v106 = vld [vmem:[#allocation6 + $0x38] sm:$0xf]
    %v107 = vld [vmem:[#allocation6 + $0x3c] sm:$0xf]
    %v124 = vunpack.c.l.b16 %v92
    %v125 = vunpack.c.l.b16 %v93
    %v126 = vunpack.c.l.b16 %v94
    %v127 = vunpack.c.l.b16 %v95
    %v128 = vunpack.c.l.b16 %v96
    %v129 = vunpack.c.l.b16 %v97
    %v130 = vunpack.c.l.b16 %v98
    %v131 = vunpack.c.l.b16 %v99
    %v132 = vunpack.c.l.b16 %v100
    %v133 = vunpack.c.l.b16 %v101
    %v134 = vunpack.c.l.b16 %v102
    %v135 = vunpack.c.l.b16 %v103
    %v136 = vunpack.c.l.b16 %v104
    %v137 = vunpack.c.l.b16 %v105
    %v138 = vunpack.c.l.b16 %v106
    %v139 = vunpack.c.l.b16 %v107
    %v140 = vpack.c.b16 %v125, %v124
    %v141 = vpack.c.b16 %v127, %v126
    %v142 = vpack.c.b16 %v129, %v128
    %v143 = vpack.c.b16 %v131, %v130
    %v144 = vpack.c.b16 %v133, %v132
    %v145 = vpack.c.b16 %v135, %v134
    %v146 = vpack.c.b16 %v137, %v136
    %v147 = vpack.c.b16 %v139, %v138
    %156 = vmatprep.subr.bf16.mxu0 0
    %157 = vmatpush1.bf16.msra.mxu0 %v140
    %158 = vmatprep.subr.bf16.mxu0 0
    %159 = vmatpush1.bf16.msra.mxu0 %v141
    %160 = vmatprep.subr.bf16.mxu0 0
    %161 = vmatpush1.bf16.msra.mxu0 %v142
    %162 = vmatprep.subr.bf16.mxu0 0
    %163 = vmatpush1.bf16.msra.mxu0 %v143
    %164 = vmatprep.subr.bf16.mxu0 0
    %165 = vmatpush1.bf16.msra.mxu0 %v144
    %166 = vmatprep.subr.bf16.mxu0 0
    %167 = vmatpush1.bf16.msra.mxu0 %v145
    %168 = vmatprep.subr.bf16.mxu0 0
    %169 = vmatpush1.bf16.msra.mxu0 %v146
    %170 = vmatprep.subr.bf16.mxu0 0
    %171 = vmatpush1.bf16.msra.mxu0 %v147
    %172 = vmatprep.subr.bf16.mxu0 0
    %173 = vmatpush1.bf16.msra.mxu0 0
    %174 = vmatprep.subr.bf16.mxu0 0
    %175 = vmatpush1.bf16.msra.mxu0 0
    %176 = vmatprep.subr.bf16.mxu0 0
    %177 = vmatpush1.bf16.msra.mxu0 0
    %178 = vmatprep.subr.bf16.mxu0 0
    %179 = vmatpush1.bf16.msra.mxu0 0
    %180 = vmatprep.subr.bf16.mxu0 0
    %181 = vmatpush1.bf16.msra.mxu0 0
    %182 = vmatprep.subr.bf16.mxu0 0
    %183 = vmatpush1.bf16.msra.mxu0 0
    %184 = vmatprep.subr.bf16.mxu0 0
    %185 = vmatpush1.bf16.msra.mxu0 0
    %186 = vmatprep.subr.bf16.mxu0 0
    %187 = vmatpush1.bf16.msra.mxu0 0
    %188 = vmatprep.mubr.bf16.mxu0 0
    %189 = vmatmul.mubr.bf16.gmra.mrb[0].mxu0 %v91
    %v190 = vpop.f32.mrb[0].mxu0
    %v191 = vadd.f32 0.0, %v190
    %v192 = vpop.f32.mrb[0].mxu0
    %v193 = vpop.f32.mrb[0].mxu0
    %v194 = vpop.f32.mrb[0].mxu0
    %195 = vdwg.mxu0
    %v196 = vadd.f32 %v89, %v191
    %197 = vst [vmem:[#allocation2] sm:$0xff] %v196
    // Predicated region
    $region46: #{tpu_custom_call.1} parent=1 // pred_check
      %p198 = pneg %p84
    $region47: #{tpu_custom_call.1} parent=1 // pred_check_branch
      %200 = sbr.rel (%p198) target = $region49
    $region48: #{tpu_custom_call.1} parent=1 // pred_region
      %v201 = vld [vmem:[#allocation2] sm:$0xff]
      %v202 = vld [vmem:[#allocation8] sm:$0x1]
      %v204 = vlaneseq
      %v205 = vshrl.u32 %v204, 7
      %v206 = vsub.s32 0, %v205
      %v207 = vrot.slane %v202, %v206
      %v209 = vadd.f32 %v201, %v207
      %v210 = vmax.f32 %v209, 0.0
      %v211 = vpack.c.bf16 %v210, %v210
      %v212 = vld [vmem:[#allocation9] sm:$0xf]
      %v213 = vld [vmem:[#allocation9 + $0x4] sm:$0xf]
      %v214 = vld [vmem:[#allocation9 + $0x8] sm:$0xf]
      %v215 = vld [vmem:[#allocation9 + $0xc] sm:$0xf]
      %v216 = vld [vmem:[#allocation9 + $0x10] sm:$0xf]
      %v217 = vld [vmem:[#allocation9 + $0x14] sm:$0xf]
      %v218 = vld [vmem:[#allocation9 + $0x18] sm:$0xf]
      %v219 = vld [vmem:[#allocation9 + $0x1c] sm:$0xf]
      %v220 = vld [vmem:[#allocation9 + $0x20] sm:$0xf]
      %v221 = vld [vmem:[#allocation9 + $0x24] sm:$0xf]
      %v222 = vld [vmem:[#allocation9 + $0x28] sm:$0xf]
      %v223 = vld [vmem:[#allocation9 + $0x2c] sm:$0xf]
      %v224 = vld [vmem:[#allocation9 + $0x30] sm:$0xf]
      %v225 = vld [vmem:[#allocation9 + $0x34] sm:$0xf]
      %v226 = vld [vmem:[#allocation9 + $0x38] sm:$0xf]
      %v227 = vld [vmem:[#allocation9 + $0x3c] sm:$0xf]
      %v228 = vld [vmem:[#allocation11] sm:$0x1]
      %v230 = vlaneseq
      %v231 = vshrl.u32 %v230, 7
      %v232 = vsub.s32 0, %v231
      %v233 = vrot.slane %v228, %v232
      %v251 = vunpack.c.l.b16 %v212
      %v252 = vunpack.c.l.b16 %v213
      %v253 = vunpack.c.l.b16 %v214
      %v254 = vunpack.c.l.b16 %v215
      %v255 = vunpack.c.l.b16 %v216
      %v256 = vunpack.c.l.b16 %v217
      %v257 = vunpack.c.l.b16 %v218
      %v258 = vunpack.c.l.b16 %v219
      %v259 = vunpack.c.l.b16 %v220
      %v260 = vunpack.c.l.b16 %v221
      %v261 = vunpack.c.l.b16 %v222
      %v262 = vunpack.c.l.b16 %v223
      %v263 = vunpack.c.l.b16 %v224
      %v264 = vunpack.c.l.b16 %v225
      %v265 = vunpack.c.l.b16 %v226
      %v266 = vunpack.c.l.b16 %v227
      %v267 = vpack.c.b16 %v252, %v251
      %v268 = vpack.c.b16 %v254, %v253
      %v269 = vpack.c.b16 %v256, %v255
      %v270 = vpack.c.b16 %v258, %v257
      %v271 = vpack.c.b16 %v260, %v259
      %v272 = vpack.c.b16 %v262, %v261
      %v273 = vpack.c.b16 %v264, %v263
      %v274 = vpack.c.b16 %v266, %v265
      %283 = vmatprep.subr.bf16.mxu0 0
      %284 = vmatpush1.bf16.msra.mxu0 %v267
      %285 = vmatprep.subr.bf16.mxu0 0
      %286 = vmatpush1.bf16.msra.mxu0 %v268
      %287 = vmatprep.subr.bf16.mxu0 0
      %288 = vmatpush1.bf16.msra.mxu0 %v269
      %289 = vmatprep.subr.bf16.mxu0 0
      %290 = vmatpush1.bf16.msra.mxu0 %v270
      %291 = vmatprep.subr.bf16.mxu0 0
      %292 = vmatpush1.bf16.msra.mxu0 %v271
      %293 = vmatprep.subr.bf16.mxu0 0
      %294 = vmatpush1.bf16.msra.mxu0 %v272
      %295 = vmatprep.subr.bf16.mxu0 0
      %296 = vmatpush1.bf16.msra.mxu0 %v273
      %297 = vmatprep.subr.bf16.mxu0 0
      %298 = vmatpush1.bf16.msra.mxu0 %v274
      %299 = vmatprep.subr.bf16.mxu0 0
      %300 = vmatpush1.bf16.msra.mxu0 0
      %301 = vmatprep.subr.bf16.mxu0 0
      %302 = vmatpush1.bf16.msra.mxu0 0
      %303 = vmatprep.subr.bf16.mxu0 0
      %304 = vmatpush1.bf16.msra.mxu0 0
      %305 = vmatprep.subr.bf16.mxu0 0
      %306 = vmatpush1.bf16.msra.mxu0 0
      %307 = vmatprep.subr.bf16.mxu0 0
      %308 = vmatpush1.bf16.msra.mxu0 0
      %309 = vmatprep.subr.bf16.mxu0 0
      %310 = vmatpush1.bf16.msra.mxu0 0
      %311 = vmatprep.subr.bf16.mxu0 0
      %312 = vmatpush1.bf16.msra.mxu0 0
      %313 = vmatprep.subr.bf16.mxu0 0
      %314 = vmatpush1.bf16.msra.mxu0 0
      %315 = vmatprep.mubr.bf16.mxu0 0
      %316 = vmatmul.mubr.bf16.gmra.mrb[0].mxu0 %v211
      %v317 = vpop.f32.mrb[0].mxu0
      %v318 = vadd.f32 %v233, %v317
      %v319 = vpop.f32.mrb[0].mxu0
      %v320 = vpop.f32.mrb[0].mxu0
      %v321 = vpop.f32.mrb[0].mxu0
      %322 = vdwg.mxu0
      %323 = vst [vmem:[#allocation12] sm:$0xff] %v318
    $region49: #{tpu_custom_call.1} parent=1 // pred_fallthru
      _
    // Predicated region
    $region50: #{tpu_custom_call.1} parent=1 // pred_check
      _
    $region51: #{tpu_custom_call.1} parent=1 // pred_check_branch
      %325 = sbr.rel (0) target = $region53
    $region52: #{tpu_custom_call.1} parent=1 // pred_region
      %s327 = ssub.s32 128, 128
      %328 = vsyncadd [#allocation5], %s327
      %s330 = sshll.u32 [#allocation12], 4
      %s331 = int_to_ptr.vmem [resolvable:$true] %s330
      %333 = dma.vmem_to_hbm [thread:$0]  %s331, 128, %s5, [#allocation5]
    $region53: #{tpu_custom_call.1} parent=1 // pred_fallthru
      _
    // Predicated region
    $region54: #{tpu_custom_call.1} parent=1 // pred_check
      _
    $region55: #{tpu_custom_call.1} parent=1 // pred_check_branch
      %335 = sbr.rel (0) target = $region57
    $region56: #{tpu_custom_call.1} parent=1 // pred_region
      %336 = dma.done [#allocation5], 128
    $region57: #{tpu_custom_call.1} parent=1 // pred_fallthru
      _
    %337 = vsyncpa [#allocation4], 1
    %338 = vsyncpa [#allocation7], 1
    %339 = vsyncpa [#allocation10], 1
    %340 = vsyncpa [#allocation5], 1

</llo_original>
